<compile_context>
chip_gen: v6e
topology: v6e:2x2x1
jax: 0.10.0
libtpu: 0.0.40
codegen_flags: <defaults>
</compile_context>

<pallas_src>
import jax
import jax.numpy as jnp
from jax.experimental import pallas as pl
from jax.experimental.pallas import tpu as pltpu


def _round_up(x, m):
    return (x + m - 1) // m * m


def _vmem_budget_and_limit():
    """Generation-aware (tile budget, vmem_limit_bytes)."""
    try:
        cap = pltpu.get_tpu_info().vmem_capacity_bytes
    except Exception:
        cap = 64 << 20                    # conservative fallback (v7x-class)
    if cap >= (100 << 20):                # v5e / v6e: 128 MiB physical VMEM
        return 48 << 20, 96 << 20
    return 20 << 20, 48 << 20             # v7x-class: 64 MiB physical VMEM


def _pick_batch_tile(B, T, V, A, OP, budget_bytes):
    """Largest sublane-aligned batch tile whose padded working set fits the budget."""
    la = _round_up(A, 128)
    lv = _round_up(V, 128)
    ltv = _round_up(T * V, 128)
    # Per batch row: double-buffered streamed blocks (lane-padded) + f32 temporaries.
    per_row = (2 * 2 * ltv                       # video block, bf16, x2 buffers
               + 2 * 4 * la                      # audio block, f32, x2 buffers
               + 2 * 4 * OP                      # output block, f32, x2 buffers
               + 4 * (2 * la + 2 * lv + 4 * OP))  # in-kernel f32 intermediates
    # Batch-independent resident weight tiles (counted double-buffered to be safe).
    fixed = 2 * (2 * T * V * lv                  # temporal-sum matrix, bf16
                 + 2 * (A + V) * OP              # wa, wv, bf16
                 + 4 * 2 * OP                    # ba, bv, f32
                 + 4 * (la + lv + 128))          # wda, wdv, bd, f32 (lane padded)
    avail = max(budget_bytes - fixed, 8 * per_row)
    tb = min(int(avail // per_row), 1024)
    # Keep >= 4 grid steps when the batch allows it: pipelining overlaps the video
    # DMA with compute and lets the batch axis shard across both TCs on v7x.
    min_steps = 4
    if B >= 8 * min_steps:
        tb = min(tb, max(8, ((-(-B // min_steps)) // 8) * 8))
    if tb >= B:
        return B                                  # block dim == full dim is legal
    return max(8, (tb // 8) * 8)                  # sublane-aligned; tail via cdiv


def fusion_kernel(audio_ref,        # (TB, A)   f32
                  video_ref,        # (TB, T*V) bf16, lane-dense flat slab
                  sum_mat_ref,      # (T*V, V)  bf16, temporal-sum matrix (resident)
                  wa_ref, ba_ref,   # (A, OP) bf16, (1, OP) f32
                  wv_ref, bv_ref,   # (V, OP) bf16, (1, OP) f32
                  wda_ref,          # (1, A) f32: watt_a[:,0]-watt_a[:,1]
                  wdv_ref,          # (1, V) f32: watt_v[:,0]-watt_v[:,1]
                  bd_ref,           # (1, 1) f32: batt[0,0]-batt[0,1]
                  out_ref):         # (TB, OP) f32
    f32 = jnp.float32
    audio = audio_ref[...].astype(f32)                               # (TB, A)
    # Temporal mean -> sum via MXU on the flat slab (1/T cancels in the normalize).
    video = jnp.dot(video_ref[...], sum_mat_ref[...],
                    preferred_element_type=f32)                      # (TB, V)

    # torch normalize: x / max(||x||, 1e-12) == x * rsqrt(max(||x||^2, 1e-24))
    eps2 = jnp.float32(1e-24)
    a_ss = jnp.sum(audio * audio, axis=1, keepdims=True)
    v_ss = jnp.sum(video * video, axis=1, keepdims=True)
    audio_n = audio * jax.lax.rsqrt(jnp.maximum(a_ss, eps2))
    video_n = video * jax.lax.rsqrt(jnp.maximum(v_ss, eps2))

    # 2-way softmax == sigmoid of the f32 logit difference (VPU mul + lane reduce + EUP).
    logit = (jnp.sum(audio_n * wda_ref[...], axis=1, keepdims=True)
             + jnp.sum(video_n * wdv_ref[...], axis=1, keepdims=True)
             + bd_ref[...])                                          # (TB, 1)
    att_a = jax.nn.sigmoid(logit)

    # Lane-dense MXU matmuls: bf16 inputs, f32 accumulation.
    a_full = jnp.dot(audio_n.astype(jnp.bfloat16), wa_ref[...],
                     preferred_element_type=f32) + ba_ref[...]       # (TB, OP)
    v_full = jnp.dot(video_n.astype(jnp.bfloat16), wv_ref[...],
                     preferred_element_type=f32) + bv_ref[...]       # (TB, OP)

    # a*att + v*(1-att) == v + att*(a - v): one fewer full-width VPU multiply.
    out_ref[...] = v_full + att_a * (a_full - v_full)


def mean_soft_attention_fusion(audio, video, params):
    """audio: (B, A) f32, video: (B, T, V) f32 -> (B, O) f32."""
    B, A = audio.shape
    _, T, V = video.shape
    O = params["wa"].shape[1]
    OP = _round_up(O, 128)   # no extra lane tile when O is already a multiple of 128

    f32, bf16 = jnp.float32, jnp.bfloat16

    # Lane-dense padded transform weights; bf16 -> MXU-native, half the weight DMA.
    wa_pack = jnp.zeros((A, OP), f32).at[:, :O].set(params["wa"]).astype(bf16)
    wv_pack = jnp.zeros((V, OP), f32).at[:, :O].set(params["wv"]).astype(bf16)
    ba_pack = jnp.zeros((1, OP), f32).at[:, :O].set(params["ba"])
    bv_pack = jnp.zeros((1, OP), f32).at[:, :O].set(params["bv"])

    # Attention linear only matters through the logit difference; keep it f32.
    wda = (params["watt_a"][:, 0] - params["watt_a"][:, 1]).reshape(1, A)
    wdv = (params["watt_v"][:, 0] - params["watt_v"][:, 1]).reshape(1, V)
    bd = (params["batt"][:, 0] - params["batt"][:, 1]).reshape(1, 1)

    # (T*V, V) summation matrix: sum_mat[t*V + v, v] = 1 -> temporal sum on the MXU.
    sum_mat = jnp.tile(jnp.eye(V, dtype=f32), (T, 1)).astype(bf16)

    # Dominant HBM read streamed as bf16, lane-dense flat slab (contiguous reshape).
    # TODO(synk): in a real pipeline the producer should emit bf16 video directly so
    # this cast fuses upstream instead of costing an extra HBM pass here.
    video_flat = video.reshape(B, T * V).astype(bf16)
    # Audio is negligible traffic (B*A); keep it f32 for norm/logit precision.

    budget, vmem_limit = _vmem_budget_and_limit()
    TB = _pick_batch_tile(B, T, V, A, OP, budget)
    grid = (pl.cdiv(B, TB),)

    out_padded = pl.pallas_call(
        fusion_kernel,
        out_shape=jax.ShapeDtypeStruct((B, OP), f32),
        grid=grid,
        in_specs=[
            pl.BlockSpec((TB, A), lambda i: (i, 0)),        # audio: streamed per batch tile
            pl.BlockSpec((TB, T * V), lambda i: (i, 0)),    # video: streamed (dominant bytes)
            pl.BlockSpec((T * V, V), lambda i: (0, 0)),     # constant index -> VMEM-resident
            pl.BlockSpec((A, OP), lambda i: (0, 0)),
            pl.BlockSpec((1, OP), lambda i: (0, 0)),
            pl.BlockSpec((V, OP), lambda i: (0, 0)),
            pl.BlockSpec((1, OP), lambda i: (0, 0)),
            pl.BlockSpec((1, A), lambda i: (0, 0)),
            pl.BlockSpec((1, V), lambda i: (0, 0)),
            pl.BlockSpec((1, 1), lambda i: (0, 0)),
        ],
        out_specs=pl.BlockSpec((TB, OP), lambda i: (i, 0)),
        compiler_params=pltpu.CompilerParams(
            # If a v7x profile shows one core doing all steps, switch this axis to
            # pltpu.CORE_PARALLEL (only core_parallel reliably changes codegen).
            dimension_semantics=("parallel",),
            vmem_limit_bytes=vmem_limit,
        ),
    )(audio, video_flat, sum_mat, wa_pack, ba_pack, wv_pack, bv_pack, wda, wdv, bd)
    return out_padded[:, :O]   # no-op copy when O == OP


def init_params(key, audio_dim, image_dim, out_dim):
    """Deterministic PyTorch-style (uniform +/- 1/sqrt(fan_in)) init."""
    ks = jax.random.split(key, 6)

    def lin(kw, kb, fan_in, fan_out):
        bound = 1.0 / jnp.sqrt(fan_in)
        w = jax.random.uniform(kw, (fan_in, fan_out), jnp.float32, -bound, bound)
        b = jax.random.uniform(kb, (1, fan_out), jnp.float32, -bound, bound)
        return w, b

    wa, ba = lin(ks[0], ks[1], audio_dim, out_dim)
    wv, bv = lin(ks[2], ks[3], image_dim, out_dim)
    watt, batt = lin(ks[4], ks[5], audio_dim + image_dim, 2)
    return {
        "wa": wa, "ba": ba,
        "wv": wv, "bv": bv,
        "watt_a": watt[:audio_dim, :],   # rows acting on the audio part of the concat
        "watt_v": watt[audio_dim:, :],   # rows acting on the video part of the concat
        "batt": batt,
    }


def reference(audio, video, p):
    """Pure-JAX f32 reference mirroring the PyTorch forward exactly."""
    video_m = jnp.mean(video, axis=1)
    eps = 1e-12
    a_n = audio / jnp.maximum(jnp.linalg.norm(audio, axis=1, keepdims=True), eps)
    v_n = video_m / jnp.maximum(jnp.linalg.norm(video_m, axis=1, keepdims=True), eps)
    logits = a_n @ p["watt_a"] + v_n @ p["watt_v"] + p["batt"]
    att = jax.nn.softmax(logits, axis=1)
    a_t = a_n @ p["wa"] + p["ba"]
    v_t = v_n @ p["wv"] + p["bv"]
    return a_t * att[:, 0:1] + v_t * att[:, 1:2]


if __name__ == "__main__":
    B, T = 2, 8
    audio_dim, image_dim, out_dim = 32, 48, 64

    key = jax.random.PRNGKey(0)
    k_audio, k_video, k_params = jax.random.split(key, 3)

    audio = jax.random.normal(k_audio, (B, audio_dim), jnp.float32)
    video = jax.random.normal(k_video, (B, T, image_dim), jnp.float32)
    params = init_params(k_params, audio_dim, image_dim, out_dim)

    out = mean_soft_attention_fusion(audio, video, params)
    out = jax.block_until_ready(out)

    ref = reference(audio, video, params)
    assert out.shape == (B, out_dim)
    # Video is streamed bf16 and transform matmuls use bf16 inputs (f32 accumulation),
    # so tolerance is loosened vs the pure-f32 reference; the attention path stays f32.
    assert jnp.allclose(out, ref, atol=2e-2, rtol=2e-2), "mismatch vs reference"

    print("KERNEL_OK")
</pallas_src>

<mosaic_0001>
module attributes {stable_mosaic.version = 11 : i64} {
  func.func @fusion_kernel(%arg0: i32, %arg1: memref<2x32xf32, #tpu.memory_space<vmem>>, %arg2: memref<2x384xbf16, #tpu.memory_space<vmem>>, %arg3: memref<384x48xbf16, #tpu.memory_space<vmem>>, %arg4: memref<32x128xbf16, #tpu.memory_space<vmem>>, %arg5: memref<1x128xf32, #tpu.memory_space<vmem>>, %arg6: memref<48x128xbf16, #tpu.memory_space<vmem>>, %arg7: memref<1x128xf32, #tpu.memory_space<vmem>>, %arg8: memref<1x32xf32, #tpu.memory_space<vmem>>, %arg9: memref<1x48xf32, #tpu.memory_space<vmem>>, %arg10: memref<1x1xf32, #tpu.memory_space<vmem>>, %arg11: memref<2x128xf32, #tpu.memory_space<vmem>>) attributes {dimension_semantics = [#tpu.dimension_semantics<parallel>], iteration_bounds = array<i64: 1>, scalar_prefetch = 0 : i64, scratch_operands = 0 : i64, tpu.core_type = #tpu.core_type<tc>, window_params = [{transform_indices = @transform_0, window_bounds = array<i64: 2, 32>}, {transform_indices = @transform_1, window_bounds = array<i64: 2, 384>}, {pipeline_mode = #tpu.pipeline_mode<synchronous>, transform_indices = @transform_2, window_bounds = array<i64: 384, 48>}, {pipeline_mode = #tpu.pipeline_mode<synchronous>, transform_indices = @transform_3, window_bounds = array<i64: 32, 128>}, {pipeline_mode = #tpu.pipeline_mode<synchronous>, transform_indices = @transform_4, window_bounds = array<i64: 1, 128>}, {pipeline_mode = #tpu.pipeline_mode<synchronous>, transform_indices = @transform_5, window_bounds = array<i64: 48, 128>}, {pipeline_mode = #tpu.pipeline_mode<synchronous>, transform_indices = @transform_6, window_bounds = array<i64: 1, 128>}, {pipeline_mode = #tpu.pipeline_mode<synchronous>, transform_indices = @transform_7, window_bounds = array<i64: 1, 32>}, {pipeline_mode = #tpu.pipeline_mode<synchronous>, transform_indices = @transform_8, window_bounds = array<i64: 1, 48>}, {pipeline_mode = #tpu.pipeline_mode<synchronous>, transform_indices = @transform_9, window_bounds = array<i64: 1, 1>}, {transform_indices = @transform_10, window_bounds = array<i64: 2, 128>}]} {
    %c0 = arith.constant 0 : index
    %c0_0 = arith.constant 0 : index
    %0 = vector.load %arg1[%c0, %c0_0] : memref<2x32xf32, #tpu.memory_space<vmem>>, vector<2x32xf32>
    %c0_1 = arith.constant 0 : index
    %c0_2 = arith.constant 0 : index
    %1 = vector.load %arg2[%c0_1, %c0_2] : memref<2x384xbf16, #tpu.memory_space<vmem>>, vector<2x384xbf16>
    %c0_3 = arith.constant 0 : index
    %c0_4 = arith.constant 0 : index
    %2 = vector.load %arg3[%c0_3, %c0_4] : memref<384x48xbf16, #tpu.memory_space<vmem>>, vector<384x48xbf16>
    %cst = arith.constant dense<0.000000e+00> : vector<2x48xf32>
    %3 = tpu.matmul %1, %2, %cst {dimension_numbers = #tpu.dot_dimension_numbers<[1], [0], [0], [1], [0, 0, 1, 1], [], []>} : vector<2x384xbf16>, vector<384x48xbf16>, vector<2x48xf32> -> vector<2x48xf32>
    %4 = arith.mulf %0, %0 : vector<2x32xf32>
    %cst_5 = arith.constant dense<0.000000e+00> : vector<2xf32>
    %5 = vector.multi_reduction <add>, %4, %cst_5 [1] : vector<2x32xf32> to vector<2xf32>
    %6 = vector.shape_cast %5 : vector<2xf32> to vector<2x1xf32>
    %7 = arith.mulf %3, %3 : vector<2x48xf32>
    %cst_6 = arith.constant dense<0.000000e+00> : vector<2xf32>
    %8 = vector.multi_reduction <add>, %7, %cst_6 [1] : vector<2x48xf32> to vector<2xf32>
    %9 = vector.shape_cast %8 : vector<2xf32> to vector<2x1xf32>
    %cst_7 = arith.constant 1.000000e-24 : f32
    %10 = vector.broadcast %cst_7 : f32 to vector<2x1xf32>
    %11 = arith.maximumf %6, %10 : vector<2x1xf32>
    %12 = math.rsqrt %11 : vector<2x1xf32>
    %13 = vector.broadcast %12 : vector<2x1xf32> to vector<2x32xf32>
    %14 = arith.mulf %0, %13 : vector<2x32xf32>
    %cst_8 = arith.constant 1.000000e-24 : f32
    %15 = vector.broadcast %cst_8 : f32 to vector<2x1xf32>
    %16 = arith.maximumf %9, %15 : vector<2x1xf32>
    %17 = math.rsqrt %16 : vector<2x1xf32>
    %18 = vector.broadcast %17 : vector<2x1xf32> to vector<2x48xf32>
    %19 = arith.mulf %3, %18 : vector<2x48xf32>
    %c0_9 = arith.constant 0 : index
    %c0_10 = arith.constant 0 : index
    %20 = vector.load %arg8[%c0_9, %c0_10] : memref<1x32xf32, #tpu.memory_space<vmem>>, vector<1x32xf32>
    %21 = vector.broadcast %20 : vector<1x32xf32> to vector<2x32xf32>
    %22 = arith.mulf %14, %21 : vector<2x32xf32>
    %cst_11 = arith.constant dense<0.000000e+00> : vector<2xf32>
    %23 = vector.multi_reduction <add>, %22, %cst_11 [1] : vector<2x32xf32> to vector<2xf32>
    %24 = vector.shape_cast %23 : vector<2xf32> to vector<2x1xf32>
    %c0_12 = arith.constant 0 : index
    %c0_13 = arith.constant 0 : index
    %25 = vector.load %arg9[%c0_12, %c0_13] : memref<1x48xf32, #tpu.memory_space<vmem>>, vector<1x48xf32>
    %26 = vector.broadcast %25 : vector<1x48xf32> to vector<2x48xf32>
    %27 = arith.mulf %19, %26 : vector<2x48xf32>
    %cst_14 = arith.constant dense<0.000000e+00> : vector<2xf32>
    %28 = vector.multi_reduction <add>, %27, %cst_14 [1] : vector<2x48xf32> to vector<2xf32>
    %29 = vector.shape_cast %28 : vector<2xf32> to vector<2x1xf32>
    %30 = arith.addf %24, %29 : vector<2x1xf32>
    %c0_15 = arith.constant 0 : index
    %c0_16 = arith.constant 0 : index
    %31 = vector.load %arg10[%c0_15, %c0_16] : memref<1x1xf32, #tpu.memory_space<vmem>>, vector<1x1xf32>
    %32 = vector.broadcast %31 : vector<1x1xf32> to vector<2x1xf32>
    %33 = arith.addf %30, %32 : vector<2x1xf32>
    %34 = arith.negf %33 : vector<2x1xf32>
    %35 = math.exp %34 : vector<2x1xf32>
    %cst_17 = arith.constant 1.000000e+00 : f32
    %36 = vector.broadcast %cst_17 : f32 to vector<2x1xf32>
    %37 = arith.addf %36, %35 : vector<2x1xf32>
    %38 = arith.divf %36, %37 : vector<2x1xf32>
    %39 = arith.truncf %14 : vector<2x32xf32> to vector<2x32xbf16>
    %c0_18 = arith.constant 0 : index
    %c0_19 = arith.constant 0 : index
    %40 = vector.load %arg4[%c0_18, %c0_19] : memref<32x128xbf16, #tpu.memory_space<vmem>>, vector<32x128xbf16>
    %cst_20 = arith.constant dense<0.000000e+00> : vector<2x128xf32>
    %41 = tpu.matmul %39, %40, %cst_20 {dimension_numbers = #tpu.dot_dimension_numbers<[1], [0], [0], [1], [0, 0, 1, 1], [], []>} : vector<2x32xbf16>, vector<32x128xbf16>, vector<2x128xf32> -> vector<2x128xf32>
    %c0_21 = arith.constant 0 : index
    %c0_22 = arith.constant 0 : index
    %42 = vector.load %arg5[%c0_21, %c0_22] : memref<1x128xf32, #tpu.memory_space<vmem>>, vector<1x128xf32>
    %43 = vector.broadcast %42 : vector<1x128xf32> to vector<2x128xf32>
    %44 = arith.addf %41, %43 : vector<2x128xf32>
    %45 = arith.truncf %19 : vector<2x48xf32> to vector<2x48xbf16>
    %c0_23 = arith.constant 0 : index
    %c0_24 = arith.constant 0 : index
    %46 = vector.load %arg6[%c0_23, %c0_24] : memref<48x128xbf16, #tpu.memory_space<vmem>>, vector<48x128xbf16>
    %cst_25 = arith.constant dense<0.000000e+00> : vector<2x128xf32>
    %47 = tpu.matmul %45, %46, %cst_25 {dimension_numbers = #tpu.dot_dimension_numbers<[1], [0], [0], [1], [0, 0, 1, 1], [], []>} : vector<2x48xbf16>, vector<48x128xbf16>, vector<2x128xf32> -> vector<2x128xf32>
    %c0_26 = arith.constant 0 : index
    %c0_27 = arith.constant 0 : index
    %48 = vector.load %arg7[%c0_26, %c0_27] : memref<1x128xf32, #tpu.memory_space<vmem>>, vector<1x128xf32>
    %49 = vector.broadcast %48 : vector<1x128xf32> to vector<2x128xf32>
    %50 = arith.addf %47, %49 : vector<2x128xf32>
    %51 = arith.subf %44, %50 : vector<2x128xf32>
    %52 = vector.broadcast %38 : vector<2x1xf32> to vector<2x128xf32>
    %53 = arith.mulf %52, %51 : vector<2x128xf32>
    %54 = arith.addf %50, %53 : vector<2x128xf32>
    %c0_28 = arith.constant 0 : index
    %c0_29 = arith.constant 0 : index
    %55 = vector.load %arg11[%c0_28, %c0_29] : memref<2x128xf32, #tpu.memory_space<vmem>>, vector<2x128xf32>
    tpu.vector_store %arg11[%c0_28, %c0_29], %54 {strides = array<i32>} : memref<2x128xf32, #tpu.memory_space<vmem>>, vector<2x128xf32>,
    return
  }
  func.func @transform_0(%arg0: i32) -> (i32, i32) {
    %c0_i32 = arith.constant 0 : i32
    %c0_i32_0 = arith.constant 0 : i32
    return %arg0, %c0_i32 : i32, i32
  }
  func.func @transform_1(%arg0: i32) -> (i32, i32) {
    %c0_i32 = arith.constant 0 : i32
    %c0_i32_0 = arith.constant 0 : i32
    return %arg0, %c0_i32 : i32, i32
  }
  func.func @transform_2(%arg0: i32) -> (i32, i32) {
    %c0_i32 = arith.constant 0 : i32
    %c0_i32_0 = arith.constant 0 : i32
    %c0_i32_1 = arith.constant 0 : i32
    return %c0_i32, %c0_i32_0 : i32, i32
  }
  func.func @transform_3(%arg0: i32) -> (i32, i32) {
    %c0_i32 = arith.constant 0 : i32
    %c0_i32_0 = arith.constant 0 : i32
    %c0_i32_1 = arith.constant 0 : i32
    return %c0_i32, %c0_i32_0 : i32, i32
  }
  func.func @transform_4(%arg0: i32) -> (i32, i32) {
    %c0_i32 = arith.constant 0 : i32
    %c0_i32_0 = arith.constant 0 : i32
    %c0_i32_1 = arith.constant 0 : i32
    return %c0_i32, %c0_i32_0 : i32, i32
  }
  func.func @transform_5(%arg0: i32) -> (i32, i32) {
    %c0_i32 = arith.constant 0 : i32
    %c0_i32_0 = arith.constant 0 : i32
    %c0_i32_1 = arith.constant 0 : i32
    return %c0_i32, %c0_i32_0 : i32, i32
  }
  func.func @transform_6(%arg0: i32) -> (i32, i32) {
    %c0_i32 = arith.constant 0 : i32
    %c0_i32_0 = arith.constant 0 : i32
    %c0_i32_1 = arith.constant 0 : i32
    return %c0_i32, %c0_i32_0 : i32, i32
  }
  func.func @transform_7(%arg0: i32) -> (i32, i32) {
    %c0_i32 = arith.constant 0 : i32
    %c0_i32_0 = arith.constant 0 : i32
    %c0_i32_1 = arith.constant 0 : i32
    return %c0_i32, %c0_i32_0 : i32, i32
  }
  func.func @transform_8(%arg0: i32) -> (i32, i32) {
    %c0_i32 = arith.constant 0 : i32
    %c0_i32_0 = arith.constant 0 : i32
    %c0_i32_1 = arith.constant 0 : i32
    return %c0_i32, %c0_i32_0 : i32, i32
  }
  func.func @transform_9(%arg0: i32) -> (i32, i32) {
    %c0_i32 = arith.constant 0 : i32
    %c0_i32_0 = arith.constant 0 : i32
    %c0_i32_1 = arith.constant 0 : i32
    return %c0_i32, %c0_i32_0 : i32, i32
  }
  func.func @transform_10(%arg0: i32) -> (i32, i32) {
    %c0_i32 = arith.constant 0 : i32
    %c0_i32_0 = arith.constant 0 : i32
    return %arg0, %c0_i32 : i32, i32
  }
}

</mosaic_0001>

<llo_original>
// kernel: tpu_custom_call.1
$region0: #{tpu_custom_call.1}
  #allocation0 [shape = 'u32[]', space=smem, size = 0x4, offset = 0x4, fixed_abs, tag = 'smem constant byte address 0x4 - core index']
  #allocation1 [shape = 'u32[144,128]{1,0:T(1,128)}', space=vmem, size = 0x12000, scoped, tag = 'internal scratch']
  #allocation2 [shape = 'f32[1,1]{1,0:T(1,128)S(1)}', space=vmem, size = 0x200, scoped, tag = 'scoped memory for tpu_custom_call.1']
  %s0 = inlined_call_operand.vmem [shape: f32[2,32], index: 0, kind: input, shape index: {}]
  %s1 = inlined_call_operand.vmem [shape: bf16[2,384], index: 1, kind: input, shape index: {}]
  %s2 = inlined_call_operand.vmem [shape: bf16[384,48], index: 2, kind: input, shape index: {}]
  %s3 = inlined_call_operand.vmem [shape: bf16[32,128], index: 3, kind: input, shape index: {}]
  %s4 = inlined_call_operand.vmem [shape: f32[1,128], index: 4, kind: input, shape index: {}]
  %s5 = inlined_call_operand.vmem [shape: bf16[48,128], index: 5, kind: input, shape index: {}]
  %s6 = inlined_call_operand.vmem [shape: f32[1,128], index: 6, kind: input, shape index: {}]
  %s7 = inlined_call_operand.vmem [shape: f32[1,32], index: 7, kind: input, shape index: {}]
  %s8 = inlined_call_operand.vmem [shape: f32[1,48], index: 8, kind: input, shape index: {}]
  %s9 = inlined_call_operand.<no memory space> [shape: f32[1,1], index: 9, kind: input, shape index: {}]
  %s10 = inlined_call_operand.hbm [shape: f32[2,128], index: 10, kind: output, shape index: {}]
  %s11 = sld [smem:[#allocation0]]
  $region50: #{tpu_custom_call.1} parent=0
    _
  %s13 = ssub.s32 1, %s11
  %s14 = scalar_select 0, %s13, %s11
  %v15 = vstv %s9
  %16 = vst [vmem:[#allocation2] sm:$0x1] %v15
  $region1: #{tpu_custom_call.1} parent=0
    #allocation3 [shape = 'u8[1024]{0}', space=vmem, size = 0x400, scoped, tag = 'output window, operand 0, single buffered']
    #allocation4 [shape = 's32[1]{0}', space=sflag, size = 0x4, scoped, tag = 'scoped memory for tpu_custom_call.1']
    %17 = vsyncpa [#allocation4], 0
    // Predicated region
    $region2: #{tpu_custom_call.1} parent=1 // pred_check
      _
    $region3: #{tpu_custom_call.1} parent=1 // pred_check_branch
      %19 = sbr.rel (0) target = $region5
    $region4: #{tpu_custom_call.1} parent=1 // pred_region
      _
    $region5: #{tpu_custom_call.1} parent=1 // pred_fallthru
      _
    // Predicated region
    $region6: #{tpu_custom_call.1} parent=1 // pred_check
      _
    $region7: #{tpu_custom_call.1} parent=1 // pred_check_branch
      %21 = sbr.rel (0) target = $region9
    $region8: #{tpu_custom_call.1} parent=1 // pred_region
      _
    $region9: #{tpu_custom_call.1} parent=1 // pred_fallthru
      _
    // Predicated region
    $region10: #{tpu_custom_call.1} parent=1 // pred_check
      _
    $region11: #{tpu_custom_call.1} parent=1 // pred_check_branch
      %23 = sbr.rel (0) target = $region13
    $region12: #{tpu_custom_call.1} parent=1 // pred_region
      _
    $region13: #{tpu_custom_call.1} parent=1 // pred_fallthru
      _
    // Predicated region
    $region14: #{tpu_custom_call.1} parent=1 // pred_check
      _
    $region15: #{tpu_custom_call.1} parent=1 // pred_check_branch
      %25 = sbr.rel (0) target = $region17
    $region16: #{tpu_custom_call.1} parent=1 // pred_region
      _
    $region17: #{tpu_custom_call.1} parent=1 // pred_fallthru
      _
    // Predicated region
    $region18: #{tpu_custom_call.1} parent=1 // pred_check
      _
    $region19: #{tpu_custom_call.1} parent=1 // pred_check_branch
      %27 = sbr.rel (0) target = $region21
    $region20: #{tpu_custom_call.1} parent=1 // pred_region
      _
    $region21: #{tpu_custom_call.1} parent=1 // pred_fallthru
      _
    // Predicated region
    $region22: #{tpu_custom_call.1} parent=1 // pred_check
      _
    $region23: #{tpu_custom_call.1} parent=1 // pred_check_branch
      %29 = sbr.rel (0) target = $region25
    $region24: #{tpu_custom_call.1} parent=1 // pred_region
      _
    $region25: #{tpu_custom_call.1} parent=1 // pred_fallthru
      _
    // Predicated region
    $region26: #{tpu_custom_call.1} parent=1 // pred_check
      _
    $region27: #{tpu_custom_call.1} parent=1 // pred_check_branch
      %31 = sbr.rel (0) target = $region29
    $region28: #{tpu_custom_call.1} parent=1 // pred_region
      _
    $region29: #{tpu_custom_call.1} parent=1 // pred_fallthru
      _
    // Predicated region
    $region30: #{tpu_custom_call.1} parent=1 // pred_check
      _
    $region31: #{tpu_custom_call.1} parent=1 // pred_check_branch
      %33 = sbr.rel (0) target = $region33
    $region32: #{tpu_custom_call.1} parent=1 // pred_region
      _
    $region33: #{tpu_custom_call.1} parent=1 // pred_fallthru
      _
    // Predicated region
    $region34: #{tpu_custom_call.1} parent=1 // pred_check
      _
    $region35: #{tpu_custom_call.1} parent=1 // pred_check_branch
      %35 = sbr.rel (0) target = $region37
    $region36: #{tpu_custom_call.1} parent=1 // pred_region
      _
    $region37: #{tpu_custom_call.1} parent=1 // pred_fallthru
      _
    // Predicated region
    $region38: #{tpu_custom_call.1} parent=1 // pred_check
      _
    $region39: #{tpu_custom_call.1} parent=1 // pred_check_branch
      %37 = sbr.rel (0) target = $region41
    $region40: #{tpu_custom_call.1} parent=1 // pred_region
      _
    $region41: #{tpu_custom_call.1} parent=1 // pred_fallthru
      _
    %v39 = vld [vmem:[%s0] sm:$0x3]
    %v40 = vld [vmem:[%s1] sm:$0x7]
    %v41 = vld [vmem:[%s2] sm:$0xf]
    %v42 = vld [vmem:[%s2 + $0x4] sm:$0xf]
    %v43 = vld [vmem:[%s2 + $0x8] sm:$0xf]
    %v44 = vld [vmem:[%s2 + $0xc] sm:$0xf]
    %v45 = vld [vmem:[%s2 + $0x10] sm:$0xf]
    %v46 = vld [vmem:[%s2 + $0x14] sm:$0xf]
    %v47 = vld [vmem:[%s2 + $0x18] sm:$0xf]
    %v48 = vld [vmem:[%s2 + $0x1c] sm:$0xf]
    %v49 = vld [vmem:[%s2 + $0x20] sm:$0xf]
    %v50 = vld [vmem:[%s2 + $0x24] sm:$0xf]
    %v51 = vld [vmem:[%s2 + $0x28] sm:$0xf]
    %v52 = vld [vmem:[%s2 + $0x2c] sm:$0xf]
    %v53 = vld [vmem:[%s2 + $0x30] sm:$0xf]
    %v54 = vld [vmem:[%s2 + $0x34] sm:$0xf]
    %v55 = vld [vmem:[%s2 + $0x38] sm:$0xf]
    %v56 = vld [vmem:[%s2 + $0x3c] sm:$0xf]
    %v57 = vld [vmem:[%s2 + $0x40] sm:$0xf]
    %v58 = vld [vmem:[%s2 + $0x44] sm:$0xf]
    %v59 = vld [vmem:[%s2 + $0x48] sm:$0xf]
    %v60 = vld [vmem:[%s2 + $0x4c] sm:$0xf]
    %v61 = vld [vmem:[%s2 + $0x50] sm:$0xf]
    %v62 = vld [vmem:[%s2 + $0x54] sm:$0xf]
    %v63 = vld [vmem:[%s2 + $0x58] sm:$0xf]
    %v64 = vld [vmem:[%s2 + $0x5c] sm:$0xf]
    %v65 = vld [vmem:[%s2 + $0x60] sm:$0xf]
    %v66 = vld [vmem:[%s2 + $0x64] sm:$0xf]
    %v67 = vld [vmem:[%s2 + $0x68] sm:$0xf]
    %v68 = vld [vmem:[%s2 + $0x6c] sm:$0xf]
    %v69 = vld [vmem:[%s2 + $0x70] sm:$0xf]
    %v70 = vld [vmem:[%s2 + $0x74] sm:$0xf]
    %v71 = vld [vmem:[%s2 + $0x78] sm:$0xf]
    %v72 = vld [vmem:[%s2 + $0x7c] sm:$0xf]
    %v73 = vld [vmem:[%s2 + $0x80] sm:$0xf]
    %v74 = vld [vmem:[%s2 + $0x84] sm:$0xf]
    %v75 = vld [vmem:[%s2 + $0x88] sm:$0xf]
    %v76 = vld [vmem:[%s2 + $0x8c] sm:$0xf]
    %v77 = vld [vmem:[%s2 + $0x90] sm:$0xf]
    %v78 = vld [vmem:[%s2 + $0x94] sm:$0xf]
    %v79 = vld [vmem:[%s2 + $0x98] sm:$0xf]
    %v80 = vld [vmem:[%s2 + $0x9c] sm:$0xf]
    %v81 = vld [vmem:[%s2 + $0xa0] sm:$0xf]
    %v82 = vld [vmem:[%s2 + $0xa4] sm:$0xf]
    %v83 = vld [vmem:[%s2 + $0xa8] sm:$0xf]
    %v84 = vld [vmem:[%s2 + $0xac] sm:$0xf]
    %v85 = vld [vmem:[%s2 + $0xb0] sm:$0xf]
    %v86 = vld [vmem:[%s2 + $0xb4] sm:$0xf]
    %v87 = vld [vmem:[%s2 + $0xb8] sm:$0xf]
    %v88 = vld [vmem:[%s2 + $0xbc] sm:$0xf]
    %v91 = vunpack.c.l.s4 1966171168
    %v92 = vunpack.c.0.s8 %v91
    %v93 = vlaneseq
    %v94 = vshrl.u32 %v93, 7
    %v95 = vsub.s32 %v92, %v94
    %v96 = vrot.slane %v40, %v95
    %v97 = vcombine.high %v96, %v96
    %v99 = vunpack.c.l.s4 1966171168
    %v100 = vunpack.c.0.s8 %v99
    %v101 = vlaneseq
    %v102 = vshrl.u32 %v101, 7
    %v103 = vsub.s32 %v100, %v102
    %v104 = vrot.slane %v96, %v103
    %v106 = vunpack.c.l.s4 1966171168
    %v107 = vunpack.c.0.s8 %v106
    %v108 = vlaneseq
    %v109 = vshrl.u32 %v108, 7
    %v110 = vsub.s32 %v107, %v109
    %v111 = vrot.slane %v97, %v110
    %v112 = vcombine.high %v104, %v104
    %v164 = vunpack.c.l.b16 %v41
    %v165 = vunpack.c.l.b16 %v42
    %v166 = vunpack.c.l.b16 %v43
    %v167 = vunpack.c.l.b16 %v44
    %v168 = vunpack.c.l.b16 %v45
    %v169 = vunpack.c.l.b16 %v46
    %v170 = vunpack.c.l.b16 %v47
    %v171 = vunpack.c.l.b16 %v48
    %v172 = vunpack.c.l.b16 %v49
    %v173 = vunpack.c.l.b16 %v50
    %v174 = vunpack.c.l.b16 %v51
    %v175 = vunpack.c.l.b16 %v52
    %v176 = vunpack.c.l.b16 %v53
    %v177 = vunpack.c.l.b16 %v54
    %v178 = vunpack.c.l.b16 %v55
    %v179 = vunpack.c.l.b16 %v56
    %v180 = vunpack.c.l.b16 %v57
    %v181 = vunpack.c.l.b16 %v58
    %v182 = vunpack.c.l.b16 %v59
    %v183 = vunpack.c.l.b16 %v60
    %v184 = vunpack.c.l.b16 %v61
    %v185 = vunpack.c.l.b16 %v62
    %v186 = vunpack.c.l.b16 %v63
    %v187 = vunpack.c.l.b16 %v64
    %v188 = vunpack.c.l.b16 %v65
    %v189 = vunpack.c.l.b16 %v66
    %v190 = vunpack.c.l.b16 %v67
    %v191 = vunpack.c.l.b16 %v68
    %v192 = vunpack.c.l.b16 %v69
    %v193 = vunpack.c.l.b16 %v70
    %v194 = vunpack.c.l.b16 %v71
    %v195 = vunpack.c.l.b16 %v72
    %v196 = vunpack.c.l.b16 %v73
    %v197 = vunpack.c.l.b16 %v74
    %v198 = vunpack.c.l.b16 %v75
    %v199 = vunpack.c.l.b16 %v76
    %v200 = vunpack.c.l.b16 %v77
    %v201 = vunpack.c.l.b16 %v78
    %v202 = vunpack.c.l.b16 %v79
    %v203 = vunpack.c.l.b16 %v80
    %v204 = vunpack.c.l.b16 %v81
    %v205 = vunpack.c.l.b16 %v82
    %v206 = vunpack.c.l.b16 %v83
    %v207 = vunpack.c.l.b16 %v84
    %v208 = vunpack.c.l.b16 %v85
    %v209 = vunpack.c.l.b16 %v86
    %v210 = vunpack.c.l.b16 %v87
    %v211 = vunpack.c.l.b16 %v88
    %v212 = vpack.c.b16 %v165, %v164
    %v213 = vpack.c.b16 %v167, %v166
    %v214 = vpack.c.b16 %v169, %v168
    %v215 = vpack.c.b16 %v171, %v170
    %v216 = vpack.c.b16 %v173, %v172
    %v217 = vpack.c.b16 %v175, %v174
    %v218 = vpack.c.b16 %v177, %v176
    %v219 = vpack.c.b16 %v179, %v178
    %v220 = vpack.c.b16 %v181, %v180
    %v221 = vpack.c.b16 %v183, %v182
    %v222 = vpack.c.b16 %v185, %v184
    %v223 = vpack.c.b16 %v187, %v186
    %v224 = vpack.c.b16 %v189, %v188
    %v225 = vpack.c.b16 %v191, %v190
    %v226 = vpack.c.b16 %v193, %v192
    %v227 = vpack.c.b16 %v195, %v194
    %v228 = vpack.c.b16 %v197, %v196
    %v229 = vpack.c.b16 %v199, %v198
    %v230 = vpack.c.b16 %v201, %v200
    %v231 = vpack.c.b16 %v203, %v202
    %v232 = vpack.c.b16 %v205, %v204
    %v233 = vpack.c.b16 %v207, %v206
    %v234 = vpack.c.b16 %v209, %v208
    %v235 = vpack.c.b16 %v211, %v210
    %260 = vmatprep.subr.bf16.mxu0 0
    %261 = vmatpush1.bf16.msra.mxu0 %v219
    %262 = vmatprep.subr.bf16.mxu0 0
    %263 = vmatpush1.bf16.msra.mxu0 %v218
    %264 = vmatprep.subr.bf16.mxu0 0
    %265 = vmatpush1.bf16.msra.mxu0 %v217
    %266 = vmatprep.subr.bf16.mxu0 0
    %267 = vmatpush1.bf16.msra.mxu0 %v216
    %268 = vmatprep.subr.bf16.mxu0 0
    %269 = vmatpush1.bf16.msra.mxu0 %v215
    %270 = vmatprep.subr.bf16.mxu0 0
    %271 = vmatpush1.bf16.msra.mxu0 %v214
    %272 = vmatprep.subr.bf16.mxu0 0
    %273 = vmatpush1.bf16.msra.mxu0 %v213
    %274 = vmatprep.subr.bf16.mxu0 0
    %275 = vmatpush1.bf16.msra.mxu0 %v212
    %276 = vmatprep.subr.bf16.mxu0 0
    %277 = vmatpush2.bf16.msra.mxu0 %v227
    %278 = vmatprep.subr.bf16.mxu0 0
    %279 = vmatpush2.bf16.msra.mxu0 %v226
    %280 = vmatprep.subr.bf16.mxu0 0
    %281 = vmatpush2.bf16.msra.mxu0 %v225
    %282 = vmatprep.subr.bf16.mxu0 0
    %283 = vmatpush2.bf16.msra.mxu0 %v224
    %284 = vmatprep.subr.bf16.mxu0 0
    %285 = vmatpush2.bf16.msra.mxu0 %v223
    %286 = vmatprep.subr.bf16.mxu0 0
    %287 = vmatpush2.bf16.msra.mxu0 %v222
    %288 = vmatprep.subr.bf16.mxu0 0
    %289 = vmatpush2.bf16.msra.mxu0 %v221
    %290 = vmatprep.subr.bf16.mxu0 0
    %291 = vmatpush2.bf16.msra.mxu0 %v220
    %292 = vmatprep.mubr.bf16.mxu0 %v111
    %293 = vmatmul.mubr.bf16.gmra.mxu0 %v104
    %v294 = vpop.f32.mrf.mxu0
    %v295 = vadd.f32 0.0, %v294
    %v296 = vpop.f32.mrf.mxu0
    %v297 = vpop.f32.mrf.mxu0
    %v298 = vpop.f32.mrf.mxu0
    %299 = vdwg.mxu0
    %300 = vmatprep.subr.bf16.mxu0 0
    %301 = vmatpush1.bf16.msra.mxu0 %v235
    %302 = vmatprep.subr.bf16.mxu0 0
    %303 = vmatpush1.bf16.msra.mxu0 %v234
    %304 = vmatprep.subr.bf16.mxu0 0
    %305 = vmatpush1.bf16.msra.mxu0 %v233
    %306 = vmatprep.subr.bf16.mxu0 0
    %307 = vmatpush1.bf16.msra.mxu0 %v232
    %308 = vmatprep.subr.bf16.mxu0 0
    %309 = vmatpush1.bf16.msra.mxu0 %v231
    %310 = vmatprep.subr.bf16.mxu0 0
    %311 = vmatpush1.bf16.msra.mxu0 %v230
    %312 = vmatprep.subr.bf16.mxu0 0
    %313 = vmatpush1.bf16.msra.mxu0 %v229
    %314 = vmatprep.subr.bf16.mxu0 0
    %315 = vmatpush1.bf16.msra.mxu0 %v228
    %316 = vmatprep.subr.bf16.mxu0 0
    %317 = vmatpush2.bf16.msra.mxu0 0
    %318 = vmatprep.subr.bf16.mxu0 0
    %319 = vmatpush2.bf16.msra.mxu0 0
    %320 = vmatprep.subr.bf16.mxu0 0
    %321 = vmatpush2.bf16.msra.mxu0 0
    %322 = vmatprep.subr.bf16.mxu0 0
    %323 = vmatpush2.bf16.msra.mxu0 0
    %324 = vmatprep.subr.bf16.mxu0 0
    %325 = vmatpush2.bf16.msra.mxu0 0
    %326 = vmatprep.subr.bf16.mxu0 0
    %327 = vmatpush2.bf16.msra.mxu0 0
    %328 = vmatprep.subr.bf16.mxu0 0
    %329 = vmatpush2.bf16.msra.mxu0 0
    %330 = vmatprep.subr.bf16.mxu0 0
    %331 = vmatpush2.bf16.msra.mxu0 0
    %332 = vmatprep.mubr.bf16.mxu0 0
    %333 = vmatmul.mubr.bf16.gmra.mxu0 %v112
    %v334 = vpop.f32.mrf.mxu0
    %v335 = vadd.f32 %v295, %v334
    %v336 = vpop.f32.mrf.mxu0
    %v337 = vpop.f32.mrf.mxu0
    %v338 = vpop.f32.mrf.mxu0
    %339 = vdwg.mxu0
    %v340 = vmul.f32 %v39, %v39
    %vm341 = vcmask 254976
    %v342 = vsel %vm341, %v340, 0.0
    %343 = vadd.xlane.f32.xlu0 %v342
    %v344 = vpop.xlane.xlu0 %343
    %v345 = vmul.f32 %v335, %v335
    %vm346 = vcmask 386048
    %v347 = vsel %vm346, %v345, 0.0
    %348 = vadd.xlane.f32.xlu0 %v347
    %v349 = vpop.xlane.xlu0 %348
    %v350 = vmax.f32 %v344, 1e-24
    %v351 = vrsqrt.pop %v350
    %v352 = vmul.f32 %v39, %v351
    %v353 = vmax.f32 %v349, 1e-24
    %v354 = vrsqrt.pop %v353
    %v355 = vmul.f32 %v335, %v354
    %v356 = vld [vmem:[%s7] sm:$0x1]
    %v358 = vlaneseq
    %v359 = vshrl.u32 %v358, 7
    %v360 = vsub.s32 0, %v359
    %v361 = vrot.slane %v356, %v360
    %v363 = vmul.f32 %v352, %v361
    %v364 = vsel %vm341, %v363, 0.0
    %365 = vadd.xlane.f32.xlu0 %v364
    %v366 = vpop.xlane.xlu0 %365
    %v367 = vld [vmem:[%s8] sm:$0x1]
    %v369 = vlaneseq
    %v370 = vshrl.u32 %v369, 7
    %v371 = vsub.s32 0, %v370
    %v372 = vrot.slane %v367, %v371
    %v374 = vmul.f32 %v355, %v372
    %v375 = vsel %vm346, %v374, 0.0
    %376 = vadd.xlane.f32.xlu0 %v375
    %v377 = vpop.xlane.xlu0 %376
    %v378 = vadd.f32 %v366, %v377
    %v379 = vld [vmem:[#allocation2] sm:$0x1]
    %v381 = vlaneseq
    %v382 = vshrl.u32 %v381, 7
    %v383 = vsub.s32 0, %v382
    %v384 = vrot.slane %v379, %v383
    %v386 = vadd.f32 %v378, %v384
    %v387 = vxor.u32 %v386, 2147483648
    %v388 = vmul.f32 %v387, 1.442695
    %v389 = vpow.pop %v388
    %v390 = vadd.f32 %v389, 1.0
    %v391 = vrcp.pop %v390
    %v392 = vmul.f32 1.0, %v391
    %v393 = vpack.c.bf16 %v352, %v352
    %v394 = vld [vmem:[%s3] sm:$0xf]
    %v395 = vld [vmem:[%s3 + $0x4] sm:$0xf]
    %v396 = vld [vmem:[%s3 + $0x8] sm:$0xf]
    %v397 = vld [vmem:[%s3 + $0xc] sm:$0xf]
    %v398 = vld [vmem:[%s4] sm:$0x1]
    %v400 = vlaneseq
    %v401 = vshrl.u32 %v400, 7
    %v402 = vsub.s32 0, %v401
    %v403 = vrot.slane %v398, %v402
    %v409 = vunpack.c.l.b16 %v394
    %v410 = vunpack.c.l.b16 %v395
    %v411 = vunpack.c.l.b16 %v396
    %v412 = vunpack.c.l.b16 %v397
    %v413 = vpack.c.b16 %v410, %v409
    %v414 = vpack.c.b16 %v412, %v411
    %vm417 = vcmask 261120
    %v419 = vsel %vm417, %v393, 0
    %421 = vmatprep.subr.bf16.mxu0 0
    %422 = vmatpush1.bf16.msra.mxu0 0
    %423 = vmatprep.subr.bf16.mxu0 0
    %424 = vmatpush1.bf16.msra.mxu0 0
    %425 = vmatprep.subr.bf16.mxu0 0
    %426 = vmatpush1.bf16.msra.mxu0 0
    %427 = vmatprep.subr.bf16.mxu0 0
    %428 = vmatpush1.bf16.msra.mxu0 0
    %429 = vmatprep.subr.bf16.mxu0 0
    %430 = vmatpush1.bf16.msra.mxu0 0
    %431 = vmatprep.subr.bf16.mxu0 0
    %432 = vmatpush1.bf16.msra.mxu0 0
    %433 = vmatprep.subr.bf16.mxu0 0
    %434 = vmatpush1.bf16.msra.mxu0 %v414
    %435 = vmatprep.subr.bf16.mxu0 0
    %436 = vmatpush1.bf16.msra.mxu0 %v413
    %437 = vmatprep.subr.bf16.mxu0 0
    %438 = vmatpush2.bf16.msra.mxu0 0
    %439 = vmatprep.subr.bf16.mxu0 0
    %440 = vmatpush2.bf16.msra.mxu0 0
    %441 = vmatprep.subr.bf16.mxu0 0
    %442 = vmatpush2.bf16.msra.mxu0 0
    %443 = vmatprep.subr.bf16.mxu0 0
    %444 = vmatpush2.bf16.msra.mxu0 0
    %445 = vmatprep.subr.bf16.mxu0 0
    %446 = vmatpush2.bf16.msra.mxu0 0
    %447 = vmatprep.subr.bf16.mxu0 0
    %448 = vmatpush2.bf16.msra.mxu0 0
    %449 = vmatprep.subr.bf16.mxu0 0
    %450 = vmatpush2.bf16.msra.mxu0 0
    %451 = vmatprep.subr.bf16.mxu0 0
    %452 = vmatpush2.bf16.msra.mxu0 0
    %453 = vmatprep.mubr.bf16.mxu0 0
    %454 = vmatmul.mubr.bf16.gmra.mxu0 %v419
    %v455 = vpop.f32.mrf.mxu0
    %v456 = vadd.f32 %v403, %v455
    %v457 = vpop.f32.mrf.mxu0
    %v458 = vpop.f32.mrf.mxu0
    %v459 = vpop.f32.mrf.mxu0
    %460 = vdwg.mxu0
    %v461 = vpack.c.bf16 %v355, %v355
    %v462 = vld [vmem:[%s5] sm:$0xf]
    %v463 = vld [vmem:[%s5 + $0x4] sm:$0xf]
    %v464 = vld [vmem:[%s5 + $0x8] sm:$0xf]
    %v465 = vld [vmem:[%s5 + $0xc] sm:$0xf]
    %v466 = vld [vmem:[%s5 + $0x10] sm:$0xf]
    %v467 = vld [vmem:[%s5 + $0x14] sm:$0xf]
    %v468 = vld [vmem:[%s6] sm:$0x1]
    %v470 = vlaneseq
    %v471 = vshrl.u32 %v470, 7
    %v472 = vsub.s32 0, %v471
    %v473 = vrot.slane %v468, %v472
    %v481 = vunpack.c.l.b16 %v462
    %v482 = vunpack.c.l.b16 %v463
    %v483 = vunpack.c.l.b16 %v464
    %v484 = vunpack.c.l.b16 %v465
    %v485 = vunpack.c.l.b16 %v466
    %v486 = vunpack.c.l.b16 %v467
    %v487 = vpack.c.b16 %v482, %v481
    %v488 = vpack.c.b16 %v484, %v483
    %v489 = vpack.c.b16 %v486, %v485
    %vm493 = vcmask 392192
    %v495 = vsel %vm493, %v461, 0
    %497 = vmatprep.subr.bf16.mxu0 0
    %498 = vmatpush1.bf16.msra.mxu0 0
    %499 = vmatprep.subr.bf16.mxu0 0
    %500 = vmatpush1.bf16.msra.mxu0 0
    %501 = vmatprep.subr.bf16.mxu0 0
    %502 = vmatpush1.bf16.msra.mxu0 0
    %503 = vmatprep.subr.bf16.mxu0 0
    %504 = vmatpush1.bf16.msra.mxu0 0
    %505 = vmatprep.subr.bf16.mxu0 0
    %506 = vmatpush1.bf16.msra.mxu0 0
    %507 = vmatprep.subr.bf16.mxu0 0
    %508 = vmatpush1.bf16.msra.mxu0 %v489
    %509 = vmatprep.subr.bf16.mxu0 0
    %510 = vmatpush1.bf16.msra.mxu0 %v488
    %511 = vmatprep.subr.bf16.mxu0 0
    %512 = vmatpush1.bf16.msra.mxu0 %v487
    %513 = vmatprep.subr.bf16.mxu0 0
    %514 = vmatpush2.bf16.msra.mxu0 0
    %515 = vmatprep.subr.bf16.mxu0 0
    %516 = vmatpush2.bf16.msra.mxu0 0
    %517 = vmatprep.subr.bf16.mxu0 0
    %518 = vmatpush2.bf16.msra.mxu0 0
    %519 = vmatprep.subr.bf16.mxu0 0
    %520 = vmatpush2.bf16.msra.mxu0 0
    %521 = vmatprep.subr.bf16.mxu0 0
    %522 = vmatpush2.bf16.msra.mxu0 0
    %523 = vmatprep.subr.bf16.mxu0 0
    %524 = vmatpush2.bf16.msra.mxu0 0
    %525 = vmatprep.subr.bf16.mxu0 0
    %526 = vmatpush2.bf16.msra.mxu0 0
    %527 = vmatprep.subr.bf16.mxu0 0
    %528 = vmatpush2.bf16.msra.mxu0 0
    %529 = vmatprep.mubr.bf16.mxu0 0
    %530 = vmatmul.mubr.bf16.gmra.mxu0 %v495
    %v531 = vpop.f32.mrf.mxu0
    %v532 = vadd.f32 %v473, %v531
    %v533 = vpop.f32.mrf.mxu0
    %v534 = vpop.f32.mrf.mxu0
    %v535 = vpop.f32.mrf.mxu0
    %536 = vdwg.mxu0
    %v537 = vsub.f32 %v456, %v532
    %539 = vset.pattern.permute.xlu0 0
    %540 = vperm.xlu0 %539, %v392
    %v541 = vpop.permute.xlu0 %540
    %v543 = vmul.f32 %v541, %v537
    %v544 = vadd.f32 %v532, %v543
    %545 = vst [vmem:[#allocation3] sm:$0x3] %v544
    // Predicated region
    $region42: #{tpu_custom_call.1} parent=1 // pred_check
      _
    $region43: #{tpu_custom_call.1} parent=1 // pred_check_branch
      %547 = sbr.rel (0) target = $region45
    $region44: #{tpu_custom_call.1} parent=1 // pred_region
      %s549 = ssub.s32 32, 32
      %550 = vsyncadd [#allocation4], %s549
      %s552 = sshll.u32 [#allocation3], 4
      %s553 = int_to_ptr.vmem [resolvable:$true] %s552
      %555 = dma.vmem_to_hbm [thread:$0]  %s553, 32, %s10, [#allocation4]
    $region45: #{tpu_custom_call.1} parent=1 // pred_fallthru
      _
    // Predicated region
    $region46: #{tpu_custom_call.1} parent=1 // pred_check
      _
    $region47: #{tpu_custom_call.1} parent=1 // pred_check_branch
      %557 = sbr.rel (0) target = $region49
    $region48: #{tpu_custom_call.1} parent=1 // pred_region
      %558 = dma.done [#allocation4], 32
    $region49: #{tpu_custom_call.1} parent=1 // pred_fallthru
      _
    %559 = vsyncpa [#allocation4], 1

</llo_original>
